<compile_context>
chip_gen: v7x
topology: tpu7x:2x2x1
jax: 0.10.0
libtpu: 0.0.40
codegen_flags: <defaults>
</compile_context>

<pallas_src>
import functools
import math

import jax
import jax.numpy as jnp
from jax import lax
from jax.experimental import pallas as pl
from jax.experimental.pallas import tpu as pltpu


# ----------------------------------------------------------------------------
# helpers
# ----------------------------------------------------------------------------
def _round_up(x, m):
    return ((x + m - 1) // m) * m


def _probe_buffered():
    """Check once whether BlockSpec(pipeline_mode=pl.Buffered(k)) lowers+runs."""
    try:
        def _copy(x_ref, o_ref):
            o_ref[...] = x_ref[...]

        spec = pl.BlockSpec((8, 128), lambda i: (0, i),
                            pipeline_mode=pl.Buffered(3))
        f = pl.pallas_call(
            _copy,
            out_shape=jax.ShapeDtypeStruct((8, 512), jnp.float32),
            grid=(4,),
            in_specs=[spec],
            out_specs=pl.BlockSpec((8, 128), lambda i: (0, i)),
        )
        jax.block_until_ready(f(jnp.zeros((8, 512), jnp.float32)))
        return True
    except Exception:
        return False


_HAS_BUFFERED = _probe_buffered()


def _bspec(block_shape, index_map, depth=None):
    """BlockSpec with optional N-deep buffering (only if the probe passed)."""
    if depth is not None and _HAS_BUFFERED:
        return pl.BlockSpec(block_shape, index_map,
                            pipeline_mode=pl.Buffered(depth))
    return pl.BlockSpec(block_shape, index_map)


def _pick_tile_cdiv(m, cap):
    """Largest lane tile (multiple of 128) <= cap for a cdiv grid over m.
    Single-TC v5e/v6e just want the biggest tile; on v7x prefer an even number
    of grid steps (2 TensorCores) when there is more than one step."""
    tile = min(cap, _round_up(m, 128))
    steps = pl.cdiv(m, tile)
    if steps > 1 and steps % 2 == 1:
        tile = _round_up(pl.cdiv(m, steps + 1), 128)
    return tile


# ----------------------------------------------------------------------------
# Pallas kernels
# ----------------------------------------------------------------------------
def _fused_mlp_kernel(x_ref, w1T_ref, b1_ref, w2T_ref, b2_ref, o_ref):
    """Fused 2-layer point MLP, channel-major results.

    x:(tm, F) f32 straight from HBM (no wrapper transpose/cast/pad passes),
    w1T:(H, F) bf16, b1:(H,1) f32, w2T:(H,H) bf16, b2:(H,1) f32
    -> o:(H, tm) bf16.  The [H, tm] intermediate never touches HBM.
    """
    x = x_ref[...].astype(jnp.bfloat16)                              # (tm, F)
    # (H,F) x (tm,F)^T -> (H, tm): contract dim 1 of both operands; the small
    # (tm, F=8) reorientation lands on the otherwise-idle XLU slot.
    h = lax.dot_general(w1T_ref[...], x, (((1,), (1,)), ((), ())),
                        preferred_element_type=jnp.float32)          # (H, tm)
    h = jnp.maximum(h + b1_ref[...], 0.0)
    y = jnp.dot(w2T_ref[...], h.astype(jnp.bfloat16),
                preferred_element_type=jnp.float32)                  # (H, tm)
    y = jnp.maximum(y + b2_ref[...], 0.0)
    o_ref[...] = y.astype(o_ref.dtype)


def pallas_point_mlp(x2d, w1T, b1, w2T, b2, *, tile_cap=4096):
    M, F_ = x2d.shape
    HID = w1T.shape[0]
    tile = _pick_tile_cdiv(M, tile_cap)
    steps = pl.cdiv(M, tile)
    depth = 3 if steps >= 3 else None
    return pl.pallas_call(
        _fused_mlp_kernel,
        out_shape=jax.ShapeDtypeStruct((HID, M), jnp.bfloat16),
        grid=(steps,),
        in_specs=[
            _bspec((tile, F_), lambda i: (i, 0), depth=depth),
            pl.BlockSpec((HID, F_), lambda i: (0, 0)),
            pl.BlockSpec((HID, 1), lambda i: (0, 0)),
            pl.BlockSpec((HID, HID), lambda i: (0, 0)),
            pl.BlockSpec((HID, 1), lambda i: (0, 0)),
        ],
        out_specs=pl.BlockSpec((HID, tile), lambda i: (0, i)),
        compiler_params=pltpu.CompilerParams(
            dimension_semantics=("parallel",)),
    )(x2d, w1T, b1, w2T, b2)


def _head_kernel(gT_ref, whT_ref, bh_ref, pred_ref, pos_ref):
    """Fused 1x1-conv head + 2-way channel softmax, final layout out.

    gT:(H, tn) bf16, whT:(C, H) bf16, bh:(C,1) f32
    -> pred:(2, tn) f32 (softmax over the first two channels)
       pos:(C-2, tn) f32 (pass-through), both lane-dense slice stores.
    """
    y = jnp.dot(whT_ref[...], gT_ref[...],
                preferred_element_type=jnp.float32) + bh_ref[...]     # (C, tn)
    d = y[0:1, :] - y[1:2, :]
    # softmax([a,b]) == [sigmoid(a-b), sigmoid(b-a)]; compute both channels
    # independently (EUP exp on a free slot) -> no 1-p cancellation.
    pred_ref[0:1, :] = 1.0 / (1.0 + jnp.exp(-d))
    pred_ref[1:2, :] = 1.0 / (1.0 + jnp.exp(d))
    pos_ref[...] = y[2:, :]


def pallas_head(gT, whT, bh, *, B, HW_pad, tile):
    HID, _ = gT.shape
    C = whT.shape[0]
    assert C > 2
    nb = HW_pad // tile
    steps = B * nb
    depth = 3 if steps >= 3 else None
    return pl.pallas_call(
        _head_kernel,
        out_shape=(
            jax.ShapeDtypeStruct((B, 2, HW_pad), jnp.float32),
            jax.ShapeDtypeStruct((B, C - 2, HW_pad), jnp.float32),
        ),
        grid=(B, nb),
        in_specs=[
            _bspec((HID, tile), lambda b, j: (0, b * nb + j), depth=depth),
            pl.BlockSpec((C, HID), lambda b, j: (0, 0)),
            pl.BlockSpec((C, 1), lambda b, j: (0, 0)),
        ],
        out_specs=(
            pl.BlockSpec((None, 2, tile), lambda b, j: (b, 0, j)),
            pl.BlockSpec((None, C - 2, tile), lambda b, j: (b, 0, j)),
        ),
        compiler_params=pltpu.CompilerParams(
            dimension_semantics=("parallel", "parallel")),
    )(gT, whT, bh)


# ----------------------------------------------------------------------------
# forward pass (JAX glue + the two Pallas kernels)
# ----------------------------------------------------------------------------
@functools.partial(jax.jit, static_argnames=("Hs", "Ws"))
def vox_asym_forward(prep, train_pt_fea_ten, train_vox_ten, *, Hs, Ws):
    B, N, F_ = train_pt_fea_ten.shape
    M = B * N
    HW = Hs * Ws

    # ---- vox_3d_generator stand-in: fused 2-layer point MLP ---------------
    # (M, F) view is free; cast/transpose are folded into the kernel so the
    # point features cross HBM exactly once on the way in.
    x2d = train_pt_fea_ten.reshape(M, F_)
    featT = pallas_point_mlp(x2d, prep["w1T"], prep["b1"],
                             prep["w2T"], prep["b2"])     # (HID, M) bf16, >= 0

    # ---- vox_3d_spconv_seg stand-in: voxel scatter-max + fused 1x1 head ---
    # TODO(synk): the real spconv sparse 3D-conv backbone (and a Pallas
    # scalar-prefetch segment-max for this voxel scatter) have no clean
    # drop-in equivalent; the data-dependent scatter-max stays in plain JAX.
    head_tile = min(8192, _round_up(HW, 128))
    HW_pad = _round_up(HW, head_tile)        # pad only to the tile multiple

    b_idx = jnp.repeat(jnp.arange(B, dtype=jnp.int32), N)
    r = jnp.clip(train_vox_ten[..., 0].reshape(-1).astype(jnp.int32), 0, Hs - 1)
    c = jnp.clip(train_vox_ten[..., 1].reshape(-1).astype(jnp.int32), 0, Ws - 1)
    flat_idx = b_idx * HW_pad + r * Ws + c
    # features are post-ReLU (>= 0), so zero-init matches the empty-voxel value.
    grid_T = jnp.zeros((featT.shape[0], B * HW_pad), jnp.bfloat16)
    grid_T = grid_T.at[:, flat_idx].max(featT)

    # ---- vox_asym.forward proper (fused into the head kernel) -------------
    pred, pos = pallas_head(grid_T, prep["whT"], prep["bh"],
                            B=B, HW_pad=HW_pad, tile=head_tile)
    out_predict = pred[:, :, :HW].reshape(B, 2, Hs, Ws)
    out_pos = pos[:, :, :HW].reshape(B, pos.shape[1], Hs, Ws)
    return out_predict, out_pos


# ----------------------------------------------------------------------------
# vox_asym wrapper (stand-in sub-modules with deterministic params)
# ----------------------------------------------------------------------------
def init_params(key, in_dim, hid, out_ch):
    ks = jax.random.split(key, 6)

    def lin(kw, kb, fan_in, fan_out):
        s = 1.0 / math.sqrt(fan_in)
        w = jax.random.uniform(kw, (fan_in, fan_out), jnp.float32, -s, s)
        b = jax.random.uniform(kb, (fan_out,), jnp.float32, -s, s)
        return w, b

    w1, b1 = lin(ks[0], ks[1], in_dim, hid)     # point MLP layer 1
    w2, b2 = lin(ks[2], ks[3], hid, hid)        # point MLP layer 2
    wh, bh = lin(ks[4], ks[5], hid, out_ch)     # 1x1-conv segmentation head
    return dict(w1=w1, b1=b1, w2=w2, b2=b2, wh=wh, bh=bh)


class VoxAsymPallas:
    """JAX/Pallas analogue of vox_asym.forward."""

    def __init__(self, params, sparse_shape):
        self.name = "vox_asym"
        self.sparse_shape = sparse_shape  # (Hs, Ws) of the dense BEV grid
        # Pre-transpose / pre-cast weights once: bf16 operands for the MXU,
        # f32 column biases for the post-matmul elementwise math.
        self.prep = dict(
            w1T=jnp.asarray(params["w1"].T, jnp.bfloat16),
            b1=jnp.asarray(params["b1"].reshape(-1, 1), jnp.float32),
            w2T=jnp.asarray(params["w2"].T, jnp.bfloat16),
            b2=jnp.asarray(params["b2"].reshape(-1, 1), jnp.float32),
            whT=jnp.asarray(params["wh"].T, jnp.bfloat16),
            bh=jnp.asarray(params["bh"].reshape(-1, 1), jnp.float32),
        )

    def __call__(self, train_pt_fea_ten, train_vox_ten):
        Hs, Ws = self.sparse_shape
        return vox_asym_forward(self.prep, train_pt_fea_ten, train_vox_ten,
                                Hs=Hs, Ws=Ws)


# ----------------------------------------------------------------------------
if __name__ == "__main__":
    B, N, F = 2, 128, 8      # batch, points-per-sample, point feature dim
    HID = 32                 # hidden width of the point MLP
    POS_CH = 2               # out_pos channels (head emits 2 + POS_CH channels)
    Hs, Ws = 16, 16          # dense BEV grid (stand-in for sparse_shape)

    key = jax.random.PRNGKey(0)
    kf, ky, kx = jax.random.split(key, 3)
    train_pt_fea_ten = jax.random.normal(kf, (B, N, F), jnp.float32)
    train_vox_ten = jnp.stack(
        [jax.random.randint(ky, (B, N), 0, Hs),
         jax.random.randint(kx, (B, N), 0, Ws)], axis=-1)

    params = init_params(jax.random.PRNGKey(42), F, HID, 2 + POS_CH)
    model = VoxAsymPallas(params, sparse_shape=(Hs, Ws))

    out_predict, out_pos = model(train_pt_fea_ten, train_vox_ten)
    jax.block_until_ready((out_predict, out_pos))

    assert out_predict.shape == (B, 2, Hs, Ws)
    assert out_pos.shape == (B, POS_CH, Hs, Ws)
    # softmax over channel dim sums to 1
    assert bool(jnp.allclose(out_predict.sum(axis=1), 1.0, atol=1e-5))

    # pure-JAX f32 reference of the same stand-in forward (bf16 tolerance)
    def ref_forward(p, pt, vox):
        HW = Hs * Ws
        x = pt.reshape(B * N, F)
        h = jnp.maximum(x @ p["w1"] + p["b1"], 0.0)
        feat = jnp.maximum(h @ p["w2"] + p["b2"], 0.0)           # (M, HID)
        b_i = jnp.repeat(jnp.arange(B), N)
        rr = jnp.clip(vox[..., 0].reshape(-1), 0, Hs - 1)
        cc = jnp.clip(vox[..., 1].reshape(-1), 0, Ws - 1)
        fl = b_i * HW + rr * Ws + cc
        g = jnp.zeros((B * HW, HID), jnp.float32).at[fl].max(feat)
        y = (g @ p["wh"] + p["bh"]).reshape(B, HW, -1)
        y = y.transpose(0, 2, 1).reshape(B, -1, Hs, Ws)
        return jax.nn.softmax(y[:, :2], axis=1), y[:, 2:]

    ref_pred, ref_pos = ref_forward(params, train_pt_fea_ten, train_vox_ten)
    assert bool(jnp.allclose(out_predict, ref_pred, atol=5e-2, rtol=5e-2))
    assert bool(jnp.allclose(out_pos, ref_pos, atol=5e-2, rtol=5e-2))
    print("KERNEL_OK")
</pallas_src>

<mosaic_0001>
module attributes {stable_mosaic.version = 11 : i64} {
  func.func @_fused_mlp_kernel(%arg0: i32, %arg1: memref<256x8xf32, #tpu.memory_space<vmem>>, %arg2: memref<32x8xbf16, #tpu.memory_space<vmem>>, %arg3: memref<32x1xf32, #tpu.memory_space<vmem>>, %arg4: memref<32x32xbf16, #tpu.memory_space<vmem>>, %arg5: memref<32x1xf32, #tpu.memory_space<vmem>>, %arg6: memref<32x256xbf16, #tpu.memory_space<vmem>>) attributes {dimension_semantics = [#tpu.dimension_semantics<parallel>], iteration_bounds = array<i64: 1>, scalar_prefetch = 0 : i64, scratch_operands = 0 : i64, tpu.core_type = #tpu.core_type<tc>, window_params = [{transform_indices = @transform_0, window_bounds = array<i64: 256, 8>}, {pipeline_mode = #tpu.pipeline_mode<synchronous>, transform_indices = @transform_1, window_bounds = array<i64: 32, 8>}, {pipeline_mode = #tpu.pipeline_mode<synchronous>, transform_indices = @transform_2, window_bounds = array<i64: 32, 1>}, {pipeline_mode = #tpu.pipeline_mode<synchronous>, transform_indices = @transform_3, window_bounds = array<i64: 32, 32>}, {pipeline_mode = #tpu.pipeline_mode<synchronous>, transform_indices = @transform_4, window_bounds = array<i64: 32, 1>}, {transform_indices = @transform_5, window_bounds = array<i64: 32, 256>}]} {
    %c0 = arith.constant 0 : index
    %c0_0 = arith.constant 0 : index
    %0 = vector.load %arg1[%c0, %c0_0] : memref<256x8xf32, #tpu.memory_space<vmem>>, vector<256x8xf32>
    %1 = arith.truncf %0 : vector<256x8xf32> to vector<256x8xbf16>
    %c0_1 = arith.constant 0 : index
    %c0_2 = arith.constant 0 : index
    %2 = vector.load %arg2[%c0_1, %c0_2] : memref<32x8xbf16, #tpu.memory_space<vmem>>, vector<32x8xbf16>
    %cst = arith.constant dense<0.000000e+00> : vector<32x256xf32>
    %3 = tpu.matmul %2, %1, %cst {dimension_numbers = #tpu.dot_dimension_numbers<[1], [1], [0], [0], [0, 0, 1, 0], [], []>} : vector<32x8xbf16>, vector<256x8xbf16>, vector<32x256xf32> -> vector<32x256xf32>
    %c0_3 = arith.constant 0 : index
    %c0_4 = arith.constant 0 : index
    %4 = vector.load %arg3[%c0_3, %c0_4] : memref<32x1xf32, #tpu.memory_space<vmem>>, vector<32x1xf32>
    %5 = vector.broadcast %4 : vector<32x1xf32> to vector<32x256xf32>
    %6 = arith.addf %3, %5 : vector<32x256xf32>
    %cst_5 = arith.constant 0.000000e+00 : f32
    %7 = vector.broadcast %cst_5 : f32 to vector<32x256xf32>
    %8 = arith.maximumf %6, %7 : vector<32x256xf32>
    %c0_6 = arith.constant 0 : index
    %c0_7 = arith.constant 0 : index
    %9 = vector.load %arg4[%c0_6, %c0_7] : memref<32x32xbf16, #tpu.memory_space<vmem>>, vector<32x32xbf16>
    %10 = arith.truncf %8 : vector<32x256xf32> to vector<32x256xbf16>
    %cst_8 = arith.constant dense<0.000000e+00> : vector<32x256xf32>
    %11 = tpu.matmul %9, %10, %cst_8 {dimension_numbers = #tpu.dot_dimension_numbers<[1], [0], [0], [1], [0, 0, 1, 1], [], []>} : vector<32x32xbf16>, vector<32x256xbf16>, vector<32x256xf32> -> vector<32x256xf32>
    %c0_9 = arith.constant 0 : index
    %c0_10 = arith.constant 0 : index
    %12 = vector.load %arg5[%c0_9, %c0_10] : memref<32x1xf32, #tpu.memory_space<vmem>>, vector<32x1xf32>
    %13 = vector.broadcast %12 : vector<32x1xf32> to vector<32x256xf32>
    %14 = arith.addf %11, %13 : vector<32x256xf32>
    %cst_11 = arith.constant 0.000000e+00 : f32
    %15 = vector.broadcast %cst_11 : f32 to vector<32x256xf32>
    %16 = arith.maximumf %14, %15 : vector<32x256xf32>
    %17 = arith.truncf %16 : vector<32x256xf32> to vector<32x256xbf16>
    %c0_12 = arith.constant 0 : index
    %c0_13 = arith.constant 0 : index
    %18 = vector.load %arg6[%c0_12, %c0_13] : memref<32x256xbf16, #tpu.memory_space<vmem>>, vector<32x256xbf16>
    tpu.vector_store %arg6[%c0_12, %c0_13], %17 {strides = array<i32>} : memref<32x256xbf16, #tpu.memory_space<vmem>>, vector<32x256xbf16>,
    return
  }
  func.func @transform_0(%arg0: i32) -> (i32, i32) {
    %c0_i32 = arith.constant 0 : i32
    %c0_i32_0 = arith.constant 0 : i32
    return %arg0, %c0_i32 : i32, i32
  }
  func.func @transform_1(%arg0: i32) -> (i32, i32) {
    %c0_i32 = arith.constant 0 : i32
    %c0_i32_0 = arith.constant 0 : i32
    %c0_i32_1 = arith.constant 0 : i32
    return %c0_i32, %c0_i32_0 : i32, i32
  }
  func.func @transform_2(%arg0: i32) -> (i32, i32) {
    %c0_i32 = arith.constant 0 : i32
    %c0_i32_0 = arith.constant 0 : i32
    %c0_i32_1 = arith.constant 0 : i32
    return %c0_i32, %c0_i32_0 : i32, i32
  }
  func.func @transform_3(%arg0: i32) -> (i32, i32) {
    %c0_i32 = arith.constant 0 : i32
    %c0_i32_0 = arith.constant 0 : i32
    %c0_i32_1 = arith.constant 0 : i32
    return %c0_i32, %c0_i32_0 : i32, i32
  }
  func.func @transform_4(%arg0: i32) -> (i32, i32) {
    %c0_i32 = arith.constant 0 : i32
    %c0_i32_0 = arith.constant 0 : i32
    %c0_i32_1 = arith.constant 0 : i32
    return %c0_i32, %c0_i32_0 : i32, i32
  }
  func.func @transform_5(%arg0: i32) -> (i32, i32) {
    %c0_i32 = arith.constant 0 : i32
    %c0_i32_0 = arith.constant 0 : i32
    return %c0_i32, %arg0 : i32, i32
  }
}

module attributes {stable_mosaic.version = 11 : i64} {
  func.func @_head_kernel(%arg0: i32, %arg1: i32, %arg2: memref<32x256xbf16, #tpu.memory_space<vmem>>, %arg3: memref<4x32xbf16, #tpu.memory_space<vmem>>, %arg4: memref<4x1xf32, #tpu.memory_space<vmem>>, %arg5: memref<1x2x256xf32, #tpu.memory_space<vmem>>, %arg6: memref<1x2x256xf32, #tpu.memory_space<vmem>>) attributes {dimension_semantics = [#tpu.dimension_semantics<parallel>, #tpu.dimension_semantics<parallel>], iteration_bounds = array<i64: 2, 1>, scalar_prefetch = 0 : i64, scratch_operands = 0 : i64, tpu.core_type = #tpu.core_type<tc>, window_params = [{transform_indices = @transform_0, window_bounds = array<i64: 32, 256>}, {pipeline_mode = #tpu.pipeline_mode<synchronous>, transform_indices = @transform_1, window_bounds = array<i64: 4, 32>}, {pipeline_mode = #tpu.pipeline_mode<synchronous>, transform_indices = @transform_2, window_bounds = array<i64: 4, 1>}, {transform_indices = @transform_3, window_bounds = array<i64: 1, 2, 256>}, {transform_indices = @transform_4, window_bounds = array<i64: 1, 2, 256>}]} {
    %c0 = arith.constant 0 : index
    %c0_0 = arith.constant 0 : index
    %0 = vector.load %arg3[%c0, %c0_0] : memref<4x32xbf16, #tpu.memory_space<vmem>>, vector<4x32xbf16>
    %c0_1 = arith.constant 0 : index
    %c0_2 = arith.constant 0 : index
    %1 = vector.load %arg2[%c0_1, %c0_2] : memref<32x256xbf16, #tpu.memory_space<vmem>>, vector<32x256xbf16>
    %cst = arith.constant dense<0.000000e+00> : vector<4x256xf32>
    %2 = tpu.matmul %0, %1, %cst {dimension_numbers = #tpu.dot_dimension_numbers<[1], [0], [0], [1], [0, 0, 1, 1], [], []>} : vector<4x32xbf16>, vector<32x256xbf16>, vector<4x256xf32> -> vector<4x256xf32>
    %c0_3 = arith.constant 0 : index
    %c0_4 = arith.constant 0 : index
    %3 = vector.load %arg4[%c0_3, %c0_4] : memref<4x1xf32, #tpu.memory_space<vmem>>, vector<4x1xf32>
    %4 = vector.broadcast %3 : vector<4x1xf32> to vector<4x256xf32>
    %5 = arith.addf %2, %4 : vector<4x256xf32>
    %6 = vector.extract_strided_slice %5 {offsets = [0, 0], sizes = [1, 256], strides = [1, 1]} : vector<4x256xf32> to vector<1x256xf32>
    %7 = vector.extract_strided_slice %5 {offsets = [1, 0], sizes = [1, 256], strides = [1, 1]} : vector<4x256xf32> to vector<1x256xf32>
    %8 = arith.subf %6, %7 : vector<1x256xf32>
    %cst_5 = arith.constant 0.000000e+00 : f32
    %9 = vector.broadcast %cst_5 : f32 to vector<1x256xf32>
    %10 = arith.subf %9, %8 : vector<1x256xf32>
    %11 = math.exp %10 : vector<1x256xf32>
    %cst_6 = arith.constant 1.000000e+00 : f32
    %12 = vector.broadcast %cst_6 : f32 to vector<1x256xf32>
    %13 = arith.addf %12, %11 : vector<1x256xf32>
    %cst_7 = arith.constant 1.000000e+00 : f32
    %14 = vector.broadcast %cst_7 : f32 to vector<1x256xf32>
    %15 = arith.divf %14, %13 : vector<1x256xf32>
    %c0_8 = arith.constant 0 : index
    %c0_9 = arith.constant 0 : index
    %c0_10 = arith.constant 0 : index
    %16 = vector.load %arg5[%c0_8, %c0_9, %c0_10] : memref<1x2x256xf32, #tpu.memory_space<vmem>>, vector<1x1x256xf32>
    %17 = vector.shape_cast %16 : vector<1x1x256xf32> to vector<1x256xf32>
    %18 = vector.shape_cast %15 : vector<1x256xf32> to vector<1x1x256xf32>
    tpu.vector_store %arg5[%c0_8, %c0_9, %c0_10], %18 {strides = array<i32>} : memref<1x2x256xf32, #tpu.memory_space<vmem>>, vector<1x1x256xf32>,
    %19 = math.exp %8 : vector<1x256xf32>
    %cst_11 = arith.constant 1.000000e+00 : f32
    %20 = vector.broadcast %cst_11 : f32 to vector<1x256xf32>
    %21 = arith.addf %20, %19 : vector<1x256xf32>
    %cst_12 = arith.constant 1.000000e+00 : f32
    %22 = vector.broadcast %cst_12 : f32 to vector<1x256xf32>
    %23 = arith.divf %22, %21 : vector<1x256xf32>
    %c0_13 = arith.constant 0 : index
    %c1 = arith.constant 1 : index
    %c0_14 = arith.constant 0 : index
    %24 = vector.load %arg5[%c0_13, %c1, %c0_14] : memref<1x2x256xf32, #tpu.memory_space<vmem>>, vector<1x1x256xf32>
    %25 = vector.shape_cast %24 : vector<1x1x256xf32> to vector<1x256xf32>
    %26 = vector.shape_cast %23 : vector<1x256xf32> to vector<1x1x256xf32>
    tpu.vector_store %arg5[%c0_13, %c1, %c0_14], %26 {strides = array<i32>} : memref<1x2x256xf32, #tpu.memory_space<vmem>>, vector<1x1x256xf32>,
    %27 = vector.extract_strided_slice %5 {offsets = [2, 0], sizes = [2, 256], strides = [1, 1]} : vector<4x256xf32> to vector<2x256xf32>
    %c0_15 = arith.constant 0 : index
    %c0_16 = arith.constant 0 : index
    %c0_17 = arith.constant 0 : index
    %28 = vector.load %arg6[%c0_15, %c0_16, %c0_17] : memref<1x2x256xf32, #tpu.memory_space<vmem>>, vector<1x2x256xf32>
    %29 = vector.shape_cast %28 : vector<1x2x256xf32> to vector<2x256xf32>
    %30 = vector.shape_cast %27 : vector<2x256xf32> to vector<1x2x256xf32>
    tpu.vector_store %arg6[%c0_15, %c0_16, %c0_17], %30 {strides = array<i32>} : memref<1x2x256xf32, #tpu.memory_space<vmem>>, vector<1x2x256xf32>,
    return
  }
  func.func @transform_0(%arg0: i32, %arg1: i32) -> (i32, i32) {
    %c1_i32 = arith.constant 1 : i32
    %0 = arith.muli %arg0, %c1_i32 : i32
    %1 = arith.addi %0, %arg1 : i32
    %c0_i32 = arith.constant 0 : i32
    %c0_i32_0 = arith.constant 0 : i32
    return %c0_i32, %1 : i32, i32
  }
  func.func @transform_1(%arg0: i32, %arg1: i32) -> (i32, i32) {
    %c0_i32 = arith.constant 0 : i32
    %c0_i32_0 = arith.constant 0 : i32
    %c0_i32_1 = arith.constant 0 : i32
    return %c0_i32, %c0_i32_0 : i32, i32
  }
  func.func @transform_2(%arg0: i32, %arg1: i32) -> (i32, i32) {
    %c0_i32 = arith.constant 0 : i32
    %c0_i32_0 = arith.constant 0 : i32
    %c0_i32_1 = arith.constant 0 : i32
    return %c0_i32, %c0_i32_0 : i32, i32
  }
  func.func @transform_3(%arg0: i32, %arg1: i32) -> (i32, i32, i32) {
    %c0_i32 = arith.constant 0 : i32
    %c0_i32_0 = arith.constant 0 : i32
    return %arg0, %c0_i32, %arg1 : i32, i32, i32
  }
  func.func @transform_4(%arg0: i32, %arg1: i32) -> (i32, i32, i32) {
    %c0_i32 = arith.constant 0 : i32
    %c0_i32_0 = arith.constant 0 : i32
    return %arg0, %c0_i32, %arg1 : i32, i32, i32
  }
}

</mosaic_0001>

<llo_original>
// kernel: vox_asym_forward.2
$region0: #{vox_asym_forward.2}
  #allocation0 [shape = 'u32[]', space=smem, size = 0x4, offset = 0x4, fixed_abs, tag = 'smem constant byte address 0x4 - core index']
  #allocation1 [shape = 'u32[144,128]{1,0:T(1,128)}', space=vmem, size = 0x12000, scoped, tag = 'internal scratch']
  %s0 = inlined_call_operand.vmem [shape: f32[256,8], index: 0, kind: input, shape index: {}]
  %s1 = inlined_call_operand.vmem [shape: bf16[32,8], index: 1, kind: input, shape index: {}]
  %s2 = inlined_call_operand.vmem [shape: f32[32,1], index: 2, kind: input, shape index: {}]
  %s3 = inlined_call_operand.vmem [shape: bf16[32,32], index: 3, kind: input, shape index: {}]
  %s4 = inlined_call_operand.vmem [shape: f32[32,1], index: 4, kind: input, shape index: {}]
  %s5 = inlined_call_operand.vmem [shape: bf16[32,256], index: 5, kind: output, shape index: {}]
  %s6 = sld [smem:[#allocation0]]
  $region30: #{vox_asym_forward.2} parent=0
    _
  %s8 = ssub.s32 1, %s6
  %s9 = scalar_select 0, %s8, %s6
  // Predicated region
  $region2: #{vox_asym_forward.2} parent=0 // pred_check
    _
  $region3: #{vox_asym_forward.2} parent=0 // pred_check_branch
    %11 = sbr.rel (0) target = $region5
  $region4: #{vox_asym_forward.2} parent=0 // pred_region
    _
  $region5: #{vox_asym_forward.2} parent=0 // pred_fallthru
    _
  // Predicated region
  $region6: #{vox_asym_forward.2} parent=0 // pred_check
    _
  $region7: #{vox_asym_forward.2} parent=0 // pred_check_branch
    %13 = sbr.rel (0) target = $region9
  $region8: #{vox_asym_forward.2} parent=0 // pred_region
    _
  $region9: #{vox_asym_forward.2} parent=0 // pred_fallthru
    _
  // Predicated region
  $region10: #{vox_asym_forward.2} parent=0 // pred_check
    _
  $region11: #{vox_asym_forward.2} parent=0 // pred_check_branch
    %15 = sbr.rel (0) target = $region13
  $region12: #{vox_asym_forward.2} parent=0 // pred_region
    _
  $region13: #{vox_asym_forward.2} parent=0 // pred_fallthru
    _
  // Predicated region
  $region14: #{vox_asym_forward.2} parent=0 // pred_check
    _
  $region15: #{vox_asym_forward.2} parent=0 // pred_check_branch
    %17 = sbr.rel (0) target = $region17
  $region16: #{vox_asym_forward.2} parent=0 // pred_region
    _
  $region17: #{vox_asym_forward.2} parent=0 // pred_fallthru
    _
  // Predicated region
  $region18: #{vox_asym_forward.2} parent=0 // pred_check
    _
  $region19: #{vox_asym_forward.2} parent=0 // pred_check_branch
    %19 = sbr.rel (0) target = $region21
  $region20: #{vox_asym_forward.2} parent=0 // pred_region
    _
  $region21: #{vox_asym_forward.2} parent=0 // pred_fallthru
    _
  %v21 = vld [vmem:[%s0] sm:$0xff]
  %v22 = vld [vmem:[%s0 + $0x8] sm:$0xff]
  %v23 = vld [vmem:[%s0 + $0x10] sm:$0xff]
  %v24 = vld [vmem:[%s0 + $0x18] sm:$0xff]
  %v25 = vld [vmem:[%s0 + $0x20] sm:$0xff]
  %v26 = vld [vmem:[%s0 + $0x28] sm:$0xff]
  %v27 = vld [vmem:[%s0 + $0x30] sm:$0xff]
  %v28 = vld [vmem:[%s0 + $0x38] sm:$0xff]
  %v29 = vld [vmem:[%s0 + $0x40] sm:$0xff]
  %v30 = vld [vmem:[%s0 + $0x48] sm:$0xff]
  %v31 = vld [vmem:[%s0 + $0x50] sm:$0xff]
  %v32 = vld [vmem:[%s0 + $0x58] sm:$0xff]
  %v33 = vld [vmem:[%s0 + $0x60] sm:$0xff]
  %v34 = vld [vmem:[%s0 + $0x68] sm:$0xff]
  %v35 = vld [vmem:[%s0 + $0x70] sm:$0xff]
  %v36 = vld [vmem:[%s0 + $0x78] sm:$0xff]
  %v37 = vld [vmem:[%s0 + $0x80] sm:$0xff]
  %v38 = vld [vmem:[%s0 + $0x88] sm:$0xff]
  %v39 = vld [vmem:[%s0 + $0x90] sm:$0xff]
  %v40 = vld [vmem:[%s0 + $0x98] sm:$0xff]
  %v41 = vld [vmem:[%s0 + $0xa0] sm:$0xff]
  %v42 = vld [vmem:[%s0 + $0xa8] sm:$0xff]
  %v43 = vld [vmem:[%s0 + $0xb0] sm:$0xff]
  %v44 = vld [vmem:[%s0 + $0xb8] sm:$0xff]
  %v45 = vld [vmem:[%s0 + $0xc0] sm:$0xff]
  %v46 = vld [vmem:[%s0 + $0xc8] sm:$0xff]
  %v47 = vld [vmem:[%s0 + $0xd0] sm:$0xff]
  %v48 = vld [vmem:[%s0 + $0xd8] sm:$0xff]
  %v49 = vld [vmem:[%s0 + $0xe0] sm:$0xff]
  %v50 = vld [vmem:[%s0 + $0xe8] sm:$0xff]
  %v51 = vld [vmem:[%s0 + $0xf0] sm:$0xff]
  %v52 = vld [vmem:[%s0 + $0xf8] sm:$0xff]
  %v53 = vpack.c.bf16 %v22, %v21
  %v54 = vpack.c.bf16 %v24, %v23
  %v55 = vpack.c.bf16 %v26, %v25
  %v56 = vpack.c.bf16 %v28, %v27
  %v57 = vpack.c.bf16 %v30, %v29
  %v58 = vpack.c.bf16 %v32, %v31
  %v59 = vpack.c.bf16 %v34, %v33
  %v60 = vpack.c.bf16 %v36, %v35
  %v61 = vpack.c.bf16 %v38, %v37
  %v62 = vpack.c.bf16 %v40, %v39
  %v63 = vpack.c.bf16 %v42, %v41
  %v64 = vpack.c.bf16 %v44, %v43
  %v65 = vpack.c.bf16 %v46, %v45
  %v66 = vpack.c.bf16 %v48, %v47
  %v67 = vpack.c.bf16 %v50, %v49
  %v68 = vpack.c.bf16 %v52, %v51
  %v69 = vld [vmem:[%s1] sm:$0xf]
  %v70 = vld [vmem:[%s1 + $0x4] sm:$0xf]
  %v71 = vld [vmem:[%s1 + $0x8] sm:$0xf]
  %v72 = vld [vmem:[%s1 + $0xc] sm:$0xf]
  %v73 = vld [vmem:[%s2] sm:$0xff]
  %v74 = vld [vmem:[%s2 + $0x8] sm:$0xff]
  %v75 = vld [vmem:[%s2 + $0x10] sm:$0xff]
  %v76 = vld [vmem:[%s2 + $0x18] sm:$0xff]
  %78 = vset.pattern.permute.xlu0 0
  %79 = vperm.xlu0 %78, %v73
  %v80 = vpop.permute.xlu0 %79
  %83 = vset.pattern.permute.xlu0 0
  %84 = vperm.xlu0 %83, %v74
  %v85 = vpop.permute.xlu0 %84
  %88 = vset.pattern.permute.xlu0 0
  %89 = vperm.xlu0 %88, %v75
  %v90 = vpop.permute.xlu0 %89
  %93 = vset.pattern.permute.xlu0 0
  %94 = vperm.xlu0 %93, %v76
  %v95 = vpop.permute.xlu0 %94
  %v101 = vunpack.c.l.b16 %v69
  %v102 = vunpack.c.l.b16 %v70
  %v103 = vunpack.c.l.b16 %v71
  %v104 = vunpack.c.l.b16 %v72
  %v105 = vpack.c.b16 %v102, %v101
  %v106 = vpack.c.b16 %v104, %v103
  %vm107 = vcmask 64512
  %v109 = vsel %vm107, %v105, 0
  %v112 = vsel %vm107, %v106, 0
  %v115 = vsel %vm107, %v53, 0
  %v118 = vsel %vm107, %v54, 0
  %v121 = vsel %vm107, %v55, 0
  %v124 = vsel %vm107, %v56, 0
  %v127 = vsel %vm107, %v57, 0
  %v130 = vsel %vm107, %v58, 0
  %v133 = vsel %vm107, %v59, 0
  %v136 = vsel %vm107, %v60, 0
  %v139 = vsel %vm107, %v61, 0
  %v142 = vsel %vm107, %v62, 0
  %v145 = vsel %vm107, %v63, 0
  %v148 = vsel %vm107, %v64, 0
  %v151 = vsel %vm107, %v65, 0
  %v154 = vsel %vm107, %v66, 0
  %v157 = vsel %vm107, %v67, 0
  %v160 = vsel %vm107, %v68, 0
  %162 = vmatprep.subr.bf16.mxu0 0
  %163 = vmatpush1.bf16.xpose.msra.mxu0 %v115
  %164 = vmatprep.subr.bf16.mxu0 0
  %165 = vmatpush1.bf16.xpose.msra.mxu0 %v118
  %166 = vmatprep.subr.bf16.mxu0 0
  %167 = vmatpush1.bf16.xpose.msra.mxu0 %v121
  %168 = vmatprep.subr.bf16.mxu0 0
  %169 = vmatpush1.bf16.xpose.msra.mxu0 %v124
  %170 = vmatprep.subr.bf16.mxu0 0
  %171 = vmatpush1.bf16.xpose.msra.mxu0 %v127
  %172 = vmatprep.subr.bf16.mxu0 0
  %173 = vmatpush1.bf16.xpose.msra.mxu0 %v130
  %174 = vmatprep.subr.bf16.mxu0 0
  %175 = vmatpush1.bf16.xpose.msra.mxu0 %v133
  %176 = vmatprep.subr.bf16.mxu0 0
  %177 = vmatpush1.bf16.xpose.msra.mxu0 %v136
  %178 = vmatprep.subr.bf16.mxu0 0
  %179 = vmatpush1.bf16.xpose.msra.mxu0 %v139
  %180 = vmatprep.subr.bf16.mxu0 0
  %181 = vmatpush1.bf16.xpose.msra.mxu0 %v142
  %182 = vmatprep.subr.bf16.mxu0 0
  %183 = vmatpush1.bf16.xpose.msra.mxu0 %v145
  %184 = vmatprep.subr.bf16.mxu0 0
  %185 = vmatpush1.bf16.xpose.msra.mxu0 %v148
  %186 = vmatprep.subr.bf16.mxu0 0
  %187 = vmatpush1.bf16.xpose.msra.mxu0 %v151
  %188 = vmatprep.subr.bf16.mxu0 0
  %189 = vmatpush1.bf16.xpose.msra.mxu0 %v154
  %190 = vmatprep.subr.bf16.mxu0 0
  %191 = vmatpush1.bf16.xpose.msra.mxu0 %v157
  %192 = vmatprep.subr.bf16.mxu0 0
  %193 = vmatpush1.bf16.xpose.msra.mxu0 %v160
  %194 = vmatprep.mubr.bf16.mxu0 0
  %195 = vmatmul.mubr.bf16.gmra.mrb[0].mxu0 %v109
  %v196 = vpop.f32.mrb[0].mxu0
  %v197 = vadd.f32 %v80, %v196
  %v198 = vpop.f32.mrb[0].mxu0
  %v199 = vadd.f32 %v80, %v198
  %v200 = vpop.f32.mrb[0].mxu0
  %v201 = vadd.f32 %v85, %v200
  %v202 = vpop.f32.mrb[0].mxu0
  %v203 = vadd.f32 %v85, %v202
  %204 = vmatprep.mubr.bf16.mxu0 0
  %205 = vmatmul.mubr.bf16.gmra.mrb[0].mxu0 %v112
  %v206 = vpop.f32.mrb[0].mxu0
  %v207 = vadd.f32 %v90, %v206
  %v208 = vpop.f32.mrb[0].mxu0
  %v209 = vadd.f32 %v90, %v208
  %v210 = vpop.f32.mrb[0].mxu0
  %v211 = vadd.f32 %v95, %v210
  %v212 = vpop.f32.mrb[0].mxu0
  %v213 = vadd.f32 %v95, %v212
  %214 = vdwg.mxu0
  %v215 = vmax.f32 %v197, 0.0
  %v216 = vmax.f32 %v199, 0.0
  %v217 = vmax.f32 %v201, 0.0
  %v218 = vmax.f32 %v203, 0.0
  %v219 = vmax.f32 %v207, 0.0
  %v220 = vmax.f32 %v209, 0.0
  %v221 = vmax.f32 %v211, 0.0
  %v222 = vmax.f32 %v213, 0.0
  %v223 = vld [vmem:[%s3] sm:$0xf]
  %v224 = vld [vmem:[%s3 + $0x4] sm:$0xf]
  %v225 = vld [vmem:[%s3 + $0x8] sm:$0xf]
  %v226 = vld [vmem:[%s3 + $0xc] sm:$0xf]
  %v227 = vpack.c.bf16 %v217, %v215
  %v228 = vpack.c.bf16 %v218, %v216
  %v229 = vpack.c.bf16 %v221, %v219
  %v230 = vpack.c.bf16 %v222, %v220
  %v231 = vld [vmem:[%s4] sm:$0xff]
  %v232 = vld [vmem:[%s4 + $0x8] sm:$0xff]
  %v233 = vld [vmem:[%s4 + $0x10] sm:$0xff]
  %v234 = vld [vmem:[%s4 + $0x18] sm:$0xff]
  %236 = vset.pattern.permute.xlu0 0
  %237 = vperm.xlu0 %236, %v231
  %v238 = vpop.permute.xlu0 %237
  %241 = vset.pattern.permute.xlu0 0
  %242 = vperm.xlu0 %241, %v232
  %v243 = vpop.permute.xlu0 %242
  %246 = vset.pattern.permute.xlu0 0
  %247 = vperm.xlu0 %246, %v233
  %v248 = vpop.permute.xlu0 %247
  %251 = vset.pattern.permute.xlu0 0
  %252 = vperm.xlu0 %251, %v234
  %v253 = vpop.permute.xlu0 %252
  %v259 = vunpack.c.l.b16 %v223
  %v260 = vunpack.c.l.b16 %v224
  %v261 = vunpack.c.l.b16 %v225
  %v262 = vunpack.c.l.b16 %v226
  %v263 = vpack.c.b16 %v260, %v259
  %v264 = vpack.c.b16 %v262, %v261
  %vm265 = vcmask 261120
  %v267 = vsel %vm265, %v263, 0
  %v270 = vsel %vm265, %v264, 0
  %272 = vmatprep.subr.bf16.mxu0 %v228
  %273 = vmatpush1.bf16.msra.mxu0 %v227
  %274 = vmatprep.subr.bf16.mxu0 %v230
  %275 = vmatpush1.bf16.msra.mxu0 %v229
  %276 = vmatprep.subr.bf16.mxu0 0
  %277 = vmatpush1.bf16.msra.mxu0 0
  %278 = vmatprep.subr.bf16.mxu0 0
  %279 = vmatpush1.bf16.msra.mxu0 0
  %280 = vmatprep.subr.bf16.mxu0 0
  %281 = vmatpush1.bf16.msra.mxu0 0
  %282 = vmatprep.subr.bf16.mxu0 0
  %283 = vmatpush1.bf16.msra.mxu0 0
  %284 = vmatprep.subr.bf16.mxu0 0
  %285 = vmatpush1.bf16.msra.mxu0 0
  %286 = vmatprep.subr.bf16.mxu0 0
  %287 = vmatpush1.bf16.msra.mxu0 0
  %288 = vmatprep.subr.bf16.mxu0 0
  %289 = vmatpush1.bf16.msra.mxu0 0
  %290 = vmatprep.subr.bf16.mxu0 0
  %291 = vmatpush1.bf16.msra.mxu0 0
  %292 = vmatprep.subr.bf16.mxu0 0
  %293 = vmatpush1.bf16.msra.mxu0 0
  %294 = vmatprep.subr.bf16.mxu0 0
  %295 = vmatpush1.bf16.msra.mxu0 0
  %296 = vmatprep.subr.bf16.mxu0 0
  %297 = vmatpush1.bf16.msra.mxu0 0
  %298 = vmatprep.subr.bf16.mxu0 0
  %299 = vmatpush1.bf16.msra.mxu0 0
  %300 = vmatprep.subr.bf16.mxu0 0
  %301 = vmatpush1.bf16.msra.mxu0 0
  %302 = vmatprep.subr.bf16.mxu0 0
  %303 = vmatpush1.bf16.msra.mxu0 0
  %304 = vmatprep.mubr.bf16.mxu0 0
  %305 = vmatmul.mubr.bf16.gmra.mrb[0].mxu0 %v267
  %v306 = vpop.f32.mrb[0].mxu0
  %v307 = vadd.f32 %v238, %v306
  %v308 = vpop.f32.mrb[0].mxu0
  %v309 = vadd.f32 %v238, %v308
  %v310 = vpop.f32.mrb[0].mxu0
  %v311 = vadd.f32 %v243, %v310
  %v312 = vpop.f32.mrb[0].mxu0
  %v313 = vadd.f32 %v243, %v312
  %314 = vmatprep.mubr.bf16.mxu0 0
  %315 = vmatmul.mubr.bf16.gmra.mrb[0].mxu0 %v270
  %v316 = vpop.f32.mrb[0].mxu0
  %v317 = vadd.f32 %v248, %v316
  %v318 = vpop.f32.mrb[0].mxu0
  %v319 = vadd.f32 %v248, %v318
  %v320 = vpop.f32.mrb[0].mxu0
  %v321 = vadd.f32 %v253, %v320
  %v322 = vpop.f32.mrb[0].mxu0
  %v323 = vadd.f32 %v253, %v322
  %324 = vdwg.mxu0
  %v325 = vmax.f32 %v307, 0.0
  %v326 = vmax.f32 %v309, 0.0
  %v327 = vmax.f32 %v311, 0.0
  %v328 = vmax.f32 %v313, 0.0
  %v329 = vmax.f32 %v317, 0.0
  %v330 = vmax.f32 %v319, 0.0
  %v331 = vmax.f32 %v321, 0.0
  %v332 = vmax.f32 %v323, 0.0
  %v333 = vpack.c.bf16 %v327, %v325
  %v334 = vpack.c.bf16 %v328, %v326
  %v335 = vpack.c.bf16 %v331, %v329
  %v336 = vpack.c.bf16 %v332, %v330
  %v341 = vunpack.c.l.b16 %v333
  %v342 = vunpack.c.l.b16 %v334
  %v343 = vunpack.c.h.b16 %v333
  %v344 = vunpack.c.h.b16 %v334
  %v345 = vunpack.c.l.b16 %v335
  %v346 = vunpack.c.l.b16 %v336
  %v347 = vunpack.c.h.b16 %v335
  %v348 = vunpack.c.h.b16 %v336
  %v349 = vpack.c.b16 %v342, %v341
  %v350 = vpack.c.b16 %v344, %v343
  %v351 = vpack.c.b16 %v346, %v345
  %v352 = vpack.c.b16 %v348, %v347
  %357 = vst [vmem:[%s5] sm:$0xff] %v349
  %358 = vst [vmem:[%s5 + $0x8] sm:$0xff] %v350
  %359 = vst [vmem:[%s5 + $0x10] sm:$0xff] %v351
  %360 = vst [vmem:[%s5 + $0x18] sm:$0xff] %v352
  // Predicated region
  $region22: #{vox_asym_forward.2} parent=0 // pred_check
    _
  $region23: #{vox_asym_forward.2} parent=0 // pred_check_branch
    %362 = sbr.rel (0) target = $region25
  $region24: #{vox_asym_forward.2} parent=0 // pred_region
    _
  $region25: #{vox_asym_forward.2} parent=0 // pred_fallthru
    _
  // Predicated region
  $region26: #{vox_asym_forward.2} parent=0 // pred_check
    _
  $region27: #{vox_asym_forward.2} parent=0 // pred_check_branch
    %364 = sbr.rel (0) target = $region29
  $region28: #{vox_asym_forward.2} parent=0 // pred_region
    _
  $region29: #{vox_asym_forward.2} parent=0 // pred_fallthru
    _

// kernel: vox_asym_forward.3
$region0: #{vox_asym_forward.3}
  #allocation0 [shape = 'u32[]', space=smem, size = 0x4, offset = 0x4, fixed_abs, tag = 'smem constant byte address 0x4 - core index']
  #allocation1 [shape = 'u32[144,128]{1,0:T(1,128)}', space=vmem, size = 0x12000, scoped, tag = 'internal scratch']
  %s0 = inlined_call_operand.vmem [shape: bf16[32,512], index: 0, kind: input, shape index: {}]
  %s1 = inlined_call_operand.vmem [shape: bf16[4,32], index: 1, kind: input, shape index: {}]
  %s2 = inlined_call_operand.vmem [shape: f32[4,1], index: 2, kind: input, shape index: {}]
  %s3 = inlined_call_operand.vmem [shape: f32[2,2,256], index: 3, kind: output, shape index: {0}]
  %s4 = inlined_call_operand.vmem [shape: f32[2,2,256], index: 4, kind: output, shape index: {1}]
  %5 = xla_tuple %s3, %s4
  %s6 = sld [smem:[#allocation0]]
  $region91: #{vox_asym_forward.3} parent=0
    _
  %s8 = ssub.s32 1, %s6
  %s9 = scalar_select 0, %s8, %s6
  $region1: #{vox_asym_forward.3} parent=0
    #allocation2 [shape = 'u8[32768]{0}', space=vmem, size = 0x8000, scoped, tag = 'input window, operand 0']
    loop: start=0, step=1, limit=4
    $region2: #{vox_asym_forward.3} parent=1 // loop_pre_header
      _
    $region3: #{vox_asym_forward.3} parent=1 // loop_header
      %s11 = sphi 0, %s15
      %p12 = scmp.ge.s32.totalorder %s11, 4
      %s18 = sphi 0, %s30
      %s19 = sphi 0, %s26
      %s20 = sphi 0, %s18
      %s21 = sphi 0, %s19
      %s22 = sphi 0, %s20
      %s23 = sphi 0, %s21
      %s35 = sphi 0, %s37
      %s38 = sphi 0, %s35
      %s39 = sphi 0, %s38
      %s55 = sphi 0, %s39
      %s59 = sphi 0, %s59
      %s61 = sphi 0, %s59
      %s62 = sphi 0, %s61
      %s76 = sphi 0, %s62
      %s80 = sphi 0, %s80
      %s82 = sphi 0, %s80
      %s83 = sphi 0, %s82
      %s97 = sphi 0, %s83
      %s105 = sphi 0, %s107
      %s108 = sphi 0, %s105
      %s109 = sphi 0, %s108
      %s125 = sphi 0, %s109
      %s133 = sphi 0, %s135
      %s136 = sphi 0, %s133
      %s137 = sphi 0, %s136
      %s153 = sphi 0, %s137
    $region4: #{vox_asym_forward.3} parent=1 // loop_header_branch
      %14 = sbr.rel (%p12) target = $region8
    $region5: #{vox_asym_forward.3} parent=1 // loop_body
      %s16 = ssub.s32 %s11, 1
      %s17 = ssub.s32 %s11, 2
      %s24 = sadd.s32 1, %s19
      %p25 = scmp.ge.s32.totalorder %s24, 1
      %s26 = scalar_select %p25, 0, %s24
      %s27 = sadd.s32 1, %s18
      %s28 = scalar_select %p25, %s27, %s18
      %p29 = scmp.ge.s32.totalorder %s28, 2
      %s30 = scalar_select %p29, 0, %s28
      %s31 = sadd.s32 %s18, %s19
      %s32 = sadd.s32 %s30, %s26
      %s33 = ssub.s32 %s31, %s32
      %p34 = scmp.eq.s32.totalorder %s33, 0
      %s36 = sadd.s32 %s35, 1
      %s37 = scalar_select %p34, %s35, %s36
      %p40 = pneg %p34
      %p41 = scmp.eq.s32.totalorder %s11, 1
      %p42 = por %p40, %p41
      %p43 = scmp.ne.s32.totalorder %s35, %s38
      %p44 = scmp.eq.s32.totalorder %s11, 0
      %p45 = por %p43, %p44
      %p46 = scmp.ne.s32.totalorder %s35, %s38
      %p47 = scmp.eq.s32.totalorder %s16, 1
      %p48 = por %p46, %p47
      %p49 = scmp.ne.s32.totalorder %s38, %s39
      %p50 = scmp.eq.s32.totalorder %s16, 0
      %p51 = por %p49, %p50
      %p52 = scmp.ne.s32.totalorder %s38, %s39
      %p53 = scmp.eq.s32.totalorder %s17, 1
      %p54 = por %p52, %p53
      %p56 = scmp.ne.s32.totalorder %s39, %s55
      %p57 = scmp.eq.s32.totalorder %s17, 0
      %p58 = por %p56, %p57
      %s60 = sadd.s32 %s59, 1
      %p63 = scmp.eq.s32.totalorder %s11, 1
      %p64 = scmp.ne.s32.totalorder %s59, %s61
      %p65 = scmp.eq.s32.totalorder %s11, 0
      %p66 = por %p64, %p65
      %p67 = scmp.ne.s32.totalorder %s59, %s61
      %p68 = scmp.eq.s32.totalorder %s16, 1
      %p69 = por %p67, %p68
      %p70 = scmp.ne.s32.totalorder %s61, %s62
      %p71 = scmp.eq.s32.totalorder %s16, 0
      %p72 = por %p70, %p71
      %p73 = scmp.ne.s32.totalorder %s61, %s62
      %p74 = scmp.eq.s32.totalorder %s17, 1
      %p75 = por %p73, %p74
      %p77 = scmp.ne.s32.totalorder %s62, %s76
      %p78 = scmp.eq.s32.totalorder %s17, 0
      %p79 = por %p77, %p78
      %s81 = sadd.s32 %s80, 1
      %p84 = scmp.eq.s32.totalorder %s11, 1
      %p85 = scmp.ne.s32.totalorder %s80, %s82
      %p86 = scmp.eq.s32.totalorder %s11, 0
      %p87 = por %p85, %p86
      %p88 = scmp.ne.s32.totalorder %s80, %s82
      %p89 = scmp.eq.s32.totalorder %s16, 1
      %p90 = por %p88, %p89
      %p91 = scmp.ne.s32.totalorder %s82, %s83
      %p92 = scmp.eq.s32.totalorder %s16, 0
      %p93 = por %p91, %p92
      %p94 = scmp.ne.s32.totalorder %s82, %s83
      %p95 = scmp.eq.s32.totalorder %s17, 1
      %p96 = por %p94, %p95
      %p98 = scmp.ne.s32.totalorder %s83, %s97
      %p99 = scmp.eq.s32.totalorder %s17, 0
      %p100 = por %p98, %p99
      %s101 = ssub.s32 %s18, %s30
      %s102 = ssub.s32 %s19, %s26
      %s103 = sor.u32 %s101, %s102
      %p104 = scmp.eq.s32.totalorder %s103, 0
      %s106 = sadd.s32 %s105, 1
      %s107 = scalar_select %p104, %s105, %s106
      %p110 = pneg %p104
      %p111 = scmp.eq.s32.totalorder %s11, 1
      %p112 = por %p110, %p111
      %p113 = scmp.ne.s32.totalorder %s105, %s108
      %p114 = scmp.eq.s32.totalorder %s11, 0
      %p115 = por %p113, %p114
      %p116 = scmp.ne.s32.totalorder %s105, %s108
      %p117 = scmp.eq.s32.totalorder %s16, 1
      %p118 = por %p116, %p117
      %p119 = scmp.ne.s32.totalorder %s108, %s109
      %p120 = scmp.eq.s32.totalorder %s16, 0
      %p121 = por %p119, %p120
      %p122 = scmp.ne.s32.totalorder %s108, %s109
      %p123 = scmp.eq.s32.totalorder %s17, 1
      %p124 = por %p122, %p123
      %p126 = scmp.ne.s32.totalorder %s109, %s125
      %p127 = scmp.eq.s32.totalorder %s17, 0
      %p128 = por %p126, %p127
      %s129 = ssub.s32 %s18, %s30
      %s130 = ssub.s32 %s19, %s26
      %s131 = sor.u32 %s129, %s130
      %p132 = scmp.eq.s32.totalorder %s131, 0
      %s134 = sadd.s32 %s133, 1
      %s135 = scalar_select %p132, %s133, %s134
      %p138 = pneg %p132
      %p139 = scmp.eq.s32.totalorder %s11, 1
      %p140 = por %p138, %p139
      %p141 = scmp.ne.s32.totalorder %s133, %s136
      %p142 = scmp.eq.s32.totalorder %s11, 0
      %p143 = por %p141, %p142
      %p144 = scmp.ne.s32.totalorder %s133, %s136
      %p145 = scmp.eq.s32.totalorder %s16, 1
      %p146 = por %p144, %p145
      %p147 = scmp.ne.s32.totalorder %s136, %s137
      %p148 = scmp.eq.s32.totalorder %s16, 0
      %p149 = por %p147, %p148
      %p150 = scmp.ne.s32.totalorder %s136, %s137
      %p151 = scmp.eq.s32.totalorder %s17, 1
      %p152 = por %p150, %p151
      %p154 = scmp.ne.s32.totalorder %s137, %s153
      %p155 = scmp.eq.s32.totalorder %s17, 0
      %p156 = por %p154, %p155
      %p157 = scmp.le.s32.totalorder 1, %s11
      %p158 = scmp.lt.s32.totalorder %s11, 3
      %p159 = pnand %p157, %p158
      %p160 = pneg %p159
      // Predicated region
      $region9: #{vox_asym_forward.3} parent=5 // pred_check
        _
      $region10: #{vox_asym_forward.3} parent=5 // pred_check_branch
        %162 = sbr.rel (%p159) target = $region12
      $region11: #{vox_asym_forward.3} parent=5 // pred_region
        %s163 = ssub.s32 %s11, 1
        // Predicated region
        $region13: #{vox_asym_forward.3} parent=11 // pred_check
          %p164 = pneg %p72
        $region14: #{vox_asym_forward.3} parent=11 // pred_check_branch
          %166 = sbr.rel (%p164) target = $region16
        $region15: #{vox_asym_forward.3} parent=11 // pred_region
          _
        $region16: #{vox_asym_forward.3} parent=11 // pred_fallthru
          _
        // Predicated region
        $region17: #{vox_asym_forward.3} parent=11 // pred_check
          %p167 = pneg %p93
        $region18: #{vox_asym_forward.3} parent=11 // pred_check_branch
          %169 = sbr.rel (%p167) target = $region20
        $region19: #{vox_asym_forward.3} parent=11 // pred_region
          _
        $region20: #{vox_asym_forward.3} parent=11 // pred_fallthru
          _
      $region12: #{vox_asym_forward.3} parent=5 // pred_fallthru
        _
      %p170 = scmp.lt.s32.totalorder %s11, 2
      // Predicated region
      $region21: #{vox_asym_forward.3} parent=5 // pred_check
        %p171 = pneg %p170
      $region22: #{vox_asym_forward.3} parent=5 // pred_check_branch
        %173 = sbr.rel (%p171) target = $region24
      $region23: #{vox_asym_forward.3} parent=5 // pred_region
        // Predicated region
        $region25: #{vox_asym_forward.3} parent=23 // pred_check
          %p174 = pneg %p45
        $region26: #{vox_asym_forward.3} parent=23 // pred_check_branch
          %176 = sbr.rel (%p174) target = $region28
        $region27: #{vox_asym_forward.3} parent=23 // pred_region
          %s177 = sand.u32 %s35, 1
          %s178 = sand.u32 %s35, 1
          %s179 = smul.addr %s178, 32
          %s180 = scalar_lea.vmem [#allocation2], %s179
          %s181 = sadd.s32 %s18, %s19
          %s182 = smul.u32 2, %s181
          %s183 = smul.addr %s182, 4
          %s184 = scalar_lea.vmem %s0, %s183
          // Predicated region
          $region29: #{vox_asym_forward.3} parent=27 // pred_check
            _
          $region30: #{vox_asym_forward.3} parent=27 // pred_check_branch
            %186 = sbr.rel (0) target = $region32
          $region31: #{vox_asym_forward.3} parent=27 // pred_region
            // Predicated region
            $region33: #{vox_asym_forward.3} parent=31 // pred_check
              _
            $region34: #{vox_asym_forward.3} parent=31 // pred_check_branch
              %188 = sbr.rel (0) target = $region36
            $region35: #{vox_asym_forward.3} parent=31 // pred_region
              // Predicated region
              $region48: #{vox_asym_forward.3} parent=35 // pred_check
                _
              $region49: #{vox_asym_forward.3} parent=35 // pred_check_branch
                %209 = sbr.rel (0) target = $region51
              $region50: #{vox_asym_forward.3} parent=35 // pred_region
                loop: start=0, step=1, limit=1
                $region52: #{vox_asym_forward.3} parent=50 // loop_pre_header
                  _
                $region53: #{vox_asym_forward.3} parent=50 // loop_header
                  %s211 = sphi 0, %s215
                  %p212 = scmp.ge.s32.totalorder %s211, 1
                  %s216 = sphi %s184, %s184
                  %s217 = sphi %s180, %s180
                $region54: #{vox_asym_forward.3} parent=50 // loop_header_branch
                  %214 = sbr.rel (%p212) target = $region58
                $region55: #{vox_asym_forward.3} parent=50 // loop_body
                  %v218 = vld [vmem:[%s216] sm:$0xff]
                  %219 = vst [vmem:[%s217] sm:$0xff] %v218
                  %v220 = vld [vmem:[%s216 + $0x10] sm:$0xff]
                  %221 = vst [vmem:[%s217 + $0x8] sm:$0xff] %v220
                  %v222 = vld [vmem:[%s216 + $0x20] sm:$0xff]
                  %223 = vst [vmem:[%s217 + $0x10] sm:$0xff] %v222
                  %v224 = vld [vmem:[%s216 + $0x30] sm:$0xff]
                  %225 = vst [vmem:[%s217 + $0x18] sm:$0xff] %v224
                $region56: #{vox_asym_forward.3} parent=50 // loop_footer
                  %s215 = sadd.s32 1, %s211
                $region57: #{vox_asym_forward.3} parent=50 // loop_footer_branch
                  %210 = sbr.rel target = $region53
                $region58: #{vox_asym_forward.3} parent=50 // loop_exit
                  _
              $region51: #{vox_asym_forward.3} parent=35 // pred_fallthru
                _
              // Predicated region
              $region59: #{vox_asym_forward.3} parent=35 // pred_check
                _
              $region60: #{vox_asym_forward.3} parent=35 // pred_check_branch
                %227 = sbr.rel target = $region62
              $region61: #{vox_asym_forward.3} parent=35 // pred_region
                _
              $region62: #{vox_asym_forward.3} parent=35 // pred_fallthru
                _
            $region36: #{vox_asym_forward.3} parent=31 // pred_fallthru
              _
            // Predicated region
            $region37: #{vox_asym_forward.3} parent=31 // pred_check
              _
            $region38: #{vox_asym_forward.3} parent=31 // pred_check_branch
              %190 = sbr.rel target = $region40
            $region39: #{vox_asym_forward.3} parent=31 // pred_region
              loop: start=0, step=1, limit=1
              $region41: #{vox_asym_forward.3} parent=39 // loop_pre_header
                _
              $region42: #{vox_asym_forward.3} parent=39 // loop_header
                %s193 = sphi 0, %s197
                %p194 = scmp.ge.s32.totalorder %s193, 1
                %s198 = sphi %s184, %s184
                %s199 = sphi %s180, %s180
              $region43: #{vox_asym_forward.3} parent=39 // loop_header_branch
                %196 = sbr.rel (%p194) target = $region47
              $region44: #{vox_asym_forward.3} parent=39 // loop_body
                %v200 = vld [vmem:[%s198] sm:$0xff]
                %201 = vst [vmem:[%s199] sm:$0xff] %v200
                %v202 = vld [vmem:[%s198 + $0x10] sm:$0xff]
                %203 = vst [vmem:[%s199 + $0x8] sm:$0xff] %v202
                %v204 = vld [vmem:[%s198 + $0x20] sm:$0xff]
                %205 = vst [vmem:[%s199 + $0x10] sm:$0xff] %v204
                %v206 = vld [vmem:[%s198 + $0x30] sm:$0xff]
                %207 = vst [vmem:[%s199 + $0x18] sm:$0xff] %v206
              $region45: #{vox_asym_forward.3} parent=39 // loop_footer
                %s197 = sadd.s32 1, %s193
              $region46: #{vox_asym_forward.3} parent=39 // loop_footer_branch
                %192 = sbr.rel target = $region42
              $region47: #{vox_asym_forward.3} parent=39 // loop_exit
                _
            $region40: #{vox_asym_forward.3} parent=31 // pred_fallthru
              _
          $region32: #{vox_asym_forward.3} parent=27 // pred_fallthru
            _
          %228 = vnop
        $region28: #{vox_asym_forward.3} parent=23 // pred_fallthru
          _
      $region24: #{vox_asym_forward.3} parent=5 // pred_fallthru
        _
      %p229 = scmp.le.s32.totalorder 1, %s11
      %p230 = scmp.lt.s32.totalorder %s11, 3
      %p231 = pnand %p229, %p230
      %p232 = pneg %p231
      // Predicated region
      $region63: #{vox_asym_forward.3} parent=5 // pred_check
        _
      $region64: #{vox_asym_forward.3} parent=5 // pred_check_branch
        %234 = sbr.rel (%p231) target = $region66
      $region65: #{vox_asym_forward.3} parent=5 // pred_region
        %s235 = ssub.s32 %s11, 1
        %s236 = sand.u32 %s38, 1
        %s237 = sand.u32 %s38, 1
        %s238 = smul.addr %s237, 32
        %s239 = scalar_lea.vmem [#allocation2], %s238
        // Predicated region
        $region67: #{vox_asym_forward.3} parent=65 // pred_check
          %p240 = pneg %p51
        $region68: #{vox_asym_forward.3} parent=65 // pred_check_branch
          %242 = sbr.rel (%p240) target = $region70
        $region69: #{vox_asym_forward.3} parent=65 // pred_region
          _
        $region70: #{vox_asym_forward.3} parent=65 // pred_fallthru
          _
        %s243 = sand.u32 %s38, 1
        %s244 = sand.u32 %s38, 1
        %s245 = smul.addr %s244, 32
        %s246 = scalar_lea.vmem [#allocation2], %s245
        %p247 = pneg %p51
        %p248 = pneg %p48
        %p249 = pneg %p72
        %p250 = pneg %p69
        %p251 = pneg %p93
        %p252 = pneg %p90
        %p253 = pneg %p121
        %p254 = pneg %p118
        %s255 = smul.u32 2, %s21
        %p256 = scmp.lt.s32.totalorder %s20, 1
        %s257 = scalar_select %p256, %s20, 1
        %p258 = scmp.lt.s32.totalorder %s255, 1
        %s259 = scalar_select %p258, %s255, 1
        %s260 = smul.addr %s257, 2
        %s261 = sadd.s32 %s259, %s260
        %s262 = smul.addr %s261, 2
        %s263 = scalar_lea.vmem %s3, %s262
        %p264 = pneg %p149
        %p265 = pneg %p146
        %s266 = smul.u32 2, %s21
        %p267 = scmp.lt.s32.totalorder %s20, 1
        %s268 = scalar_select %p267, %s20, 1
        %p269 = scmp.lt.s32.totalorder %s266, 1
        %s270 = scalar_select %p269, %s266, 1
        %s271 = smul.addr %s268, 2
        %s272 = sadd.s32 %s270, %s271
        %s273 = smul.addr %s272, 2
        %s274 = scalar_lea.vmem %s4, %s273
        %s275 = sadd.s32 %s20, %s21
        %s276 = smul.u32 2, %s275
        %s277 = smul.u32 2, %s21
        %p278 = scmp.lt.s32.totalorder %s20, 1
        %s279 = scalar_select %p278, %s20, 1
        %p280 = scmp.lt.s32.totalorder %s277, 1
        %s281 = scalar_select %p280, %s277, 1
        %s282 = smul.addr %s279, 2
        %s283 = sadd.s32 %s281, %s282
        %s284 = smul.addr %s283, 2
        %s285 = scalar_lea.vmem %s3, %s284
        %s286 = smul.u32 2, %s21
        %s287 = smul.u32 2, %s21
        %p288 = scmp.lt.s32.totalorder %s20, 1
        %s289 = scalar_select %p288, %s20, 1
        %p290 = scmp.lt.s32.totalorder %s287, 1
        %s291 = scalar_select %p290, %s287, 1
        %s292 = smul.addr %s289, 2
        %s293 = sadd.s32 %s291, %s292
        %s294 = smul.addr %s293, 2
        %s295 = scalar_lea.vmem %s4, %s294
        %s296 = smul.u32 2, %s21
        %v298 = vld [vmem:[%s1] sm:$0x3]
        %v299 = vld [vmem:[%s239] sm:$0xff]
        %v300 = vld [vmem:[%s239 + $0x8] sm:$0xff]
        %v301 = vld [vmem:[%s239 + $0x10] sm:$0xff]
        %v302 = vld [vmem:[%s239 + $0x18] sm:$0xff]
        %v303 = vld [vmem:[%s2] sm:$0xf]
        %305 = vset.pattern.permute.xlu0 0
        %306 = vperm.xlu0 %305, %v303
        %v307 = vpop.permute.xlu0 %306
        %v313 = vunpack.c.l.b16 %v299
        %v314 = vunpack.c.h.b16 %v299
        %v315 = vunpack.c.l.b16 %v300
        %v316 = vunpack.c.h.b16 %v300
        %v317 = vunpack.c.l.b16 %v301
        %v318 = vunpack.c.h.b16 %v301
        %v319 = vunpack.c.l.b16 %v302
        %v320 = vunpack.c.h.b16 %v302
        %v321 = vpack.c.b16 %v315, %v313
        %v322 = vpack.c.b16 %v316, %v314
        %v323 = vpack.c.b16 %v319, %v317
        %v324 = vpack.c.b16 %v320, %v318
        %vm329 = vcmask 261120
        %v331 = vsel %vm329, %v298, 0
        %333 = vmatprep.subr.bf16.mxu0 %v322
        %334 = vmatpush1.bf16.msra.mxu0 %v321
        %335 = vmatprep.subr.bf16.mxu0 %v324
        %336 = vmatpush1.bf16.msra.mxu0 %v323
        %337 = vmatprep.subr.bf16.mxu0 0
        %338 = vmatpush1.bf16.msra.mxu0 0
        %339 = vmatprep.subr.bf16.mxu0 0
        %340 = vmatpush1.bf16.msra.mxu0 0
        %341 = vmatprep.subr.bf16.mxu0 0
        %342 = vmatpush1.bf16.msra.mxu0 0
        %343 = vmatprep.subr.bf16.mxu0 0
        %344 = vmatpush1.bf16.msra.mxu0 0
        %345 = vmatprep.subr.bf16.mxu0 0
        %346 = vmatpush1.bf16.msra.mxu0 0
        %347 = vmatprep.subr.bf16.mxu0 0
        %348 = vmatpush1.bf16.msra.mxu0 0
        %349 = vmatprep.subr.bf16.mxu0 0
        %350 = vmatpush1.bf16.msra.mxu0 0
        %351 = vmatprep.subr.bf16.mxu0 0
        %352 = vmatpush1.bf16.msra.mxu0 0
        %353 = vmatprep.subr.bf16.mxu0 0
        %354 = vmatpush1.bf16.msra.mxu0 0
        %355 = vmatprep.subr.bf16.mxu0 0
        %356 = vmatpush1.bf16.msra.mxu0 0
        %357 = vmatprep.subr.bf16.mxu0 0
        %358 = vmatpush1.bf16.msra.mxu0 0
        %359 = vmatprep.subr.bf16.mxu0 0
        %360 = vmatpush1.bf16.msra.mxu0 0
        %361 = vmatprep.subr.bf16.mxu0 0
        %362 = vmatpush1.bf16.msra.mxu0 0
        %363 = vmatprep.subr.bf16.mxu0 0
        %364 = vmatpush1.bf16.msra.mxu0 0
        %365 = vmatprep.mubr.bf16.mxu0 0
        %366 = vmatmul.mubr.bf16.gmra.mrb[0].mxu0 %v331
        %v367 = vpop.f32.mrb[0].mxu0
        %v368 = vadd.f32 %v307, %v367
        %v369 = vpop.f32.mrb[0].mxu0
        %v370 = vadd.f32 %v307, %v369
        %v371 = vpop.f32.mrb[0].mxu0
        %v372 = vpop.f32.mrb[0].mxu0
        %373 = vdwg.mxu0
        %v376 = vrot.slane %v368, 1
        %v377 = vrot.slane %v370, 1
        %v380 = vsub.f32 %v368, %v376
        %v381 = vsub.f32 %v370, %v377
        %v382 = vsub.f32 0.0, %v380
        %v383 = vsub.f32 0.0, %v381
        %v384 = vmul.f32 %v382, 1.442695
        %v385 = vpow.pop %v384
        %v386 = vmul.f32 %v383, 1.442695
        %v387 = vpow.pop %v386
        %v388 = vadd.f32 %v385, 1.0
        %v389 = vadd.f32 %v387, 1.0
        %v390 = vrcp.pop %v388
        %v391 = vmul.f32 1.0, %v390
        %v392 = vrcp.pop %v389
        %v393 = vmul.f32 1.0, %v392
        %v396 = vcombine.low %v391, %v393
        %v398 = vunpack.c.l.s4 1966171168
        %v399 = vunpack.c.0.s8 %v398
        %v400 = vlaneseq
        %v401 = vshrl.u32 %v400, 7
        %v402 = vsub.s32 %v399, %v401
        %v403 = vrot.slane %v396, %v402
        %v405 = vunpack.c.l.s4 1966171168
        %v406 = vunpack.c.0.s8 %v405
        %v407 = vlaneseq
        %v408 = vshrl.u32 %v407, 7
        %v409 = vsub.s32 %v406, %v408
        %v410 = vrot.slane %v403, %v409
        %v412 = vlaneseq
        %vm413 = vcmp.ge.s32.totalorder %v412, 0
        %vm414 = vcmp.lt.s32.totalorder %v412, 256
        %vm415 = vmand %vm413, %vm414
        %416 = vst.msk [vmem:[%s285] ss:$2 sm:$0x3] %vm415, %v410
        %v417 = vmul.f32 %v380, 1.442695
        %v418 = vpow.pop %v417
        %v419 = vmul.f32 %v381, 1.442695
        %v420 = vpow.pop %v419
        %v421 = vadd.f32 %v418, 1.0
        %v422 = vadd.f32 %v420, 1.0
        %v423 = vrcp.pop %v421
        %v424 = vmul.f32 1.0, %v423
        %v425 = vrcp.pop %v422
        %v426 = vmul.f32 1.0, %v425
        %v429 = vcombine.low %v424, %v426
        %v431 = vunpack.c.l.s4 1966171168
        %v432 = vunpack.c.0.s8 %v431
        %v433 = vlaneseq
        %v434 = vshrl.u32 %v433, 7
        %v435 = vsub.s32 %v432, %v434
        %v436 = vrot.slane %v429, %v435
        %v438 = vunpack.c.l.s4 1966171168
        %v439 = vunpack.c.0.s8 %v438
        %v440 = vlaneseq
        %v441 = vshrl.u32 %v440, 7
        %v442 = vsub.s32 %v439, %v441
        %v443 = vrot.slane %v436, %v442
        %s445 = scalar_lea.vmem %s285, 1
        %446 = vst.msk [vmem:[%s445] ss:$2 sm:$0x3] %vm415, %v443
        %v447 = vcombine.low %v368, %v370
        %v449 = vunpack.c.l.s4 1983009808
        %v450 = vunpack.c.0.s8 %v449
        %v451 = vlaneseq
        %v452 = vshrl.u32 %v451, 7
        %v453 = vsub.s32 %v450, %v452
        %v454 = vrot.slane %v447, %v453
        %v455 = vcombine.high %v454, %v454
        %457 = vst [vmem:[%s295] sm:$0xf] %v455
        %s458 = smul.u32 2, %s21
        %p459 = scmp.lt.s32.totalorder %s20, 1
        %s460 = scalar_select %p459, %s20, 1
        %p461 = scmp.lt.s32.totalorder %s458, 1
        %s462 = scalar_select %p461, %s458, 1
        %s463 = smul.addr %s460, 2
        %s464 = sadd.s32 %s462, %s463
        %s465 = smul.addr %s464, 2
        %s466 = scalar_lea.vmem %s3, %s465
        %s467 = smul.u32 2, %s21
        %p468 = scmp.lt.s32.totalorder %s20, 1
        %s469 = scalar_select %p468, %s20, 1
        %p470 = scmp.lt.s32.totalorder %s467, 1
        %s471 = scalar_select %p470, %s467, 1
        %s472 = smul.addr %s469, 2
        %s473 = sadd.s32 %s471, %s472
        %s474 = smul.addr %s473, 2
        %s475 = scalar_lea.vmem %s4, %s474
        // Predicated region
        $region71: #{vox_asym_forward.3} parent=65 // pred_check
          %p476 = pneg %p118
        $region72: #{vox_asym_forward.3} parent=65 // pred_check_branch
          %478 = sbr.rel (%p476) target = $region74
        $region73: #{vox_asym_forward.3} parent=65 // pred_region
          %s479 = smul.u32 2, %s21
        $region74: #{vox_asym_forward.3} parent=65 // pred_fallthru
          _
        // Predicated region
        $region75: #{vox_asym_forward.3} parent=65 // pred_check
          %p480 = pneg %p146
        $region76: #{vox_asym_forward.3} parent=65 // pred_check_branch
          %482 = sbr.rel (%p480) target = $region78
        $region77: #{vox_asym_forward.3} parent=65 // pred_region
          %s483 = smul.u32 2, %s21
        $region78: #{vox_asym_forward.3} parent=65 // pred_fallthru
          _
      $region66: #{vox_asym_forward.3} parent=5 // pred_fallthru
        _
      %p484 = scmp.le.s32.totalorder 2, %s11
      // Predicated region
      $region79: #{vox_asym_forward.3} parent=5 // pred_check
        %p485 = pneg %p484
      $region80: #{vox_asym_forward.3} parent=5 // pred_check_branch
        %487 = sbr.rel (%p485) target = $region82
      $region81: #{vox_asym_forward.3} parent=5 // pred_region
        %s488 = ssub.s32 %s11, 2
        // Predicated region
        $region83: #{vox_asym_forward.3} parent=81 // pred_check
          %p489 = pneg %p124
        $region84: #{vox_asym_forward.3} parent=81 // pred_check_branch
          %491 = sbr.rel (%p489) target = $region86
        $region85: #{vox_asym_forward.3} parent=81 // pred_region
          %s492 = smul.u32 2, %s23
          %p493 = scmp.lt.s32.totalorder %s22, 1
          %s494 = scalar_select %p493, %s22, 1
          %p495 = scmp.lt.s32.totalorder %s492, 1
          %s496 = scalar_select %p495, %s492, 1
          %s497 = smul.addr %s494, 2
          %s498 = sadd.s32 %s496, %s497
          %s499 = smul.addr %s498, 2
          %s500 = scalar_lea.vmem %s3, %s499
        $region86: #{vox_asym_forward.3} parent=81 // pred_fallthru
          _
        // Predicated region
        $region87: #{vox_asym_forward.3} parent=81 // pred_check
          %p501 = pneg %p152
        $region88: #{vox_asym_forward.3} parent=81 // pred_check_branch
          %503 = sbr.rel (%p501) target = $region90
        $region89: #{vox_asym_forward.3} parent=81 // pred_region
          %s504 = smul.u32 2, %s23
          %p505 = scmp.lt.s32.totalorder %s22, 1
          %s506 = scalar_select %p505, %s22, 1
          %p507 = scmp.lt.s32.totalorder %s504, 1
          %s508 = scalar_select %p507, %s504, 1
          %s509 = smul.addr %s506, 2
          %s510 = sadd.s32 %s508, %s509
          %s511 = smul.addr %s510, 2
          %s512 = scalar_lea.vmem %s4, %s511
        $region90: #{vox_asym_forward.3} parent=81 // pred_fallthru
          _
      $region82: #{vox_asym_forward.3} parent=5 // pred_fallthru
        _
    $region6: #{vox_asym_forward.3} parent=1 // loop_footer
      %s15 = sadd.s32 1, %s11
    $region7: #{vox_asym_forward.3} parent=1 // loop_footer_branch
      %10 = sbr.rel target = $region3
    $region8: #{vox_asym_forward.3} parent=1 // loop_exit
      _

</llo_original>
